<compile_context>
chip_gen: v7x
topology: tpu7x:2x2x1
jax: 0.10.0
libtpu: 0.0.40
codegen_flags: <defaults>
</compile_context>

<pallas_src>
import functools
import math

import jax
import jax.numpy as jnp
from jax.experimental import pallas as pl
from jax.experimental.pallas import tpu as pltpu


def _cdan_kernel(g_s_ref, f_s_ref, g_t_ref, f_t_ref,
                 w1_ref, b1_ref, w2_ref, b2_ref, w3t_ref, b3_ref,
                 loss_ref, h_scratch,
                 *, num_classes, feat_dim, tile_src, tile_tgt, total_batch):
    step = pl.program_id(0)

    @pl.when(step == 0)
    def _init():
        loss_ref[...] = jnp.zeros_like(loss_ref)

    def scale_into_slab(g, f, row_off, rows):
        # softmax over classes (torch detaches it; forward value identical).
        g32 = g.astype(jnp.float32)
        g32 = g32 - jnp.max(g32, axis=1, keepdims=True)
        eg = jnp.exp(g32)
        # exact reciprocal (approx=True would be cheaper but slightly lossy)
        p = eg * pl.reciprocal(jnp.sum(eg, axis=1, keepdims=True), approx=False)
        f32 = f.astype(jnp.float32)
        # MultiLinearMap: h[b, c*F + j] = p[b, c] * f[b, j]
        # Input-side scaling written one class block of lanes at a time
        # (static slices); the (tile, C*F) slab is then one long-K matmul.
        for c in range(num_classes):
            h_scratch[row_off:row_off + rows,
                      c * feat_dim:(c + 1) * feat_dim] = (
                          p[:, c:c + 1] * f32).astype(h_scratch.dtype)

    scale_into_slab(g_s_ref[...], f_s_ref[...], 0, tile_src)
    scale_into_slab(g_t_ref[...], f_t_ref[...], tile_src, tile_tgt)

    # Domain discriminator: single long-K contraction over C*F, then H x H,
    # then the H -> 1 projection as an elementwise-multiply + lane reduction
    # (avoids padding the MXU output to 128/256 lanes for one useful column).
    h = h_scratch[...]
    d1 = jnp.dot(h, w1_ref[...], preferred_element_type=jnp.float32)
    d1 = jnp.maximum(d1 + b1_ref[...].astype(jnp.float32), 0.0)
    d2 = jnp.dot(d1.astype(w2_ref.dtype), w2_ref[...],
                 preferred_element_type=jnp.float32)
    d2 = jnp.maximum(d2 + b2_ref[...].astype(jnp.float32), 0.0)
    logits = jnp.sum(d2 * w3t_ref[...].astype(jnp.float32),
                     axis=-1, keepdims=True) + b3_ref[0, 0]
    d = jax.nn.sigmoid(logits)

    # Domain labels: the first tile_src rows of every tile are source (=1).
    row = jax.lax.broadcasted_iota(jnp.int32, logits.shape, 0)
    y = (row < tile_src).astype(jnp.float32)

    # Binary cross entropy (torch clamps log at -100); sum over this tile and
    # accumulate into the resident (1,1) output block.
    log_d = jnp.maximum(jnp.log(d), -100.0)
    log_1md = jnp.maximum(jnp.log(1.0 - d), -100.0)
    bce = -(y * log_d + (1.0 - y) * log_1md)
    loss_ref[...] += jnp.sum(bce, axis=(0, 1), keepdims=True)

    @pl.when(step == pl.num_programs(0) - 1)
    def _finalize():
        # mean reduction over the FULL batch, not the per-tile count.
        loss_ref[...] = loss_ref[...] / float(total_batch)


def _num_batch_tiles(bs, bt, max_tile_rows):
    """Fewest grid steps whose per-step (src+tgt) rows fit the budget while
    keeping each tile sublane-aligned (multiple of 8) or equal to the full dim."""
    for n in range(1, bs + bt + 1):
        if bs % n or bt % n:
            continue
        tbs, tbt = bs // n, bt // n
        if tbs + tbt > max_tile_rows:
            continue
        if (tbs == bs or tbs % 8 == 0) and (tbt == bt or tbt % 8 == 0):
            return n
    return 1


def cdan_loss(g_s, f_s, g_t, f_t, params, *, max_tile_rows=512):
    """Fused CDAN forward loss. No wrapper-side concat/cast: all glue is in-kernel."""
    w1, b1, w2, b2, w3, b3 = params
    Bs, C = g_s.shape
    Bt = g_t.shape[0]
    F = f_s.shape[1]
    H = w1.shape[1]
    assert w1.shape[0] == C * F and f_t.shape[1] == F and g_t.shape[1] == C

    n_tiles = _num_batch_tiles(Bs, Bt, max_tile_rows)
    tbs, tbt = Bs // n_tiles, Bt // n_tiles

    # Last H->1 layer is applied as a lane reduction; feed w3 transposed (1, H).
    w3t = w3.reshape(1, H)

    def nbytes(shape, dtype):
        return math.prod(shape) * jnp.dtype(dtype).itemsize

    act_bytes = (nbytes((tbs, C), g_s.dtype) + nbytes((tbs, F), f_s.dtype)
                 + nbytes((tbt, C), g_t.dtype) + nbytes((tbt, F), f_t.dtype))
    w_bytes = sum(nbytes(a.shape, a.dtype) for a in (w1, b1, w2, b2, w3t))
    scratch_bytes = nbytes((tbs + tbt, C * F), f_s.dtype)
    vmem_limit = int(2 * (act_bytes + w_bytes) + scratch_bytes + (4 << 20))
    vmem_limit = max(8 << 20, min(vmem_limit, 64 << 20))

    kernel = functools.partial(
        _cdan_kernel,
        num_classes=C, feat_dim=F,
        tile_src=tbs, tile_tgt=tbt,
        total_batch=Bs + Bt,
    )

    in_specs = [
        pl.BlockSpec((tbs, C), lambda i: (i, 0)),       # g_s tile
        pl.BlockSpec((tbs, F), lambda i: (i, 0)),       # f_s tile
        pl.BlockSpec((tbt, C), lambda i: (i, 0)),       # g_t tile
        pl.BlockSpec((tbt, F), lambda i: (i, 0)),       # f_t tile
        pl.BlockSpec((C * F, H), lambda i: (0, 0)),     # w1 (resident)
        pl.BlockSpec((1, H), lambda i: (0, 0)),         # b1
        pl.BlockSpec((H, H), lambda i: (0, 0)),         # w2
        pl.BlockSpec((1, H), lambda i: (0, 0)),         # b2
        pl.BlockSpec((1, H), lambda i: (0, 0)),         # w3^T
        pl.BlockSpec((1, 1), lambda i: (0, 0),
                     memory_space=pltpu.MemorySpace.SMEM),   # b3 scalar
    ]

    loss = pl.pallas_call(
        kernel,
        out_shape=jax.ShapeDtypeStruct((1, 1), jnp.float32),
        grid=(n_tiles,),
        in_specs=in_specs,
        # resident accumulator block across the batch axis
        out_specs=pl.BlockSpec((1, 1), lambda i: (0, 0)),
        scratch_shapes=[pltpu.VMEM((tbs + tbt, C * F), f_s.dtype)],
        compiler_params=pltpu.CompilerParams(
            # batch axis carries the loss accumulator -> must be "arbitrary"
            dimension_semantics=("arbitrary",),
            vmem_limit_bytes=vmem_limit,
        ),
    )(g_s, f_s, g_t, f_t, w1, b1, w2, b2, w3t, b3)
    return loss[0, 0]


def cdan_loss_reference(g_s, f_s, g_t, f_t, params):
    """Plain-JAX reference mirroring the PyTorch forward pass."""
    w1, b1, w2, b2, w3, b3 = params
    hp = jax.lax.Precision.HIGHEST
    f = jnp.concatenate([f_s, f_t], axis=0).astype(jnp.float32)
    g = jax.nn.softmax(
        jnp.concatenate([g_s, g_t], axis=0).astype(jnp.float32), axis=1)
    B = f.shape[0]
    # MultiLinearMap: bmm(g[:, :, None], f[:, None, :]).reshape(B, -1)
    h = (g[:, :, None] * f[:, None, :]).reshape(B, -1)
    d1 = jnp.maximum(jnp.dot(h, w1, precision=hp) + b1, 0.0)
    d2 = jnp.maximum(jnp.dot(d1, w2, precision=hp) + b2, 0.0)
    d = jax.nn.sigmoid(jnp.dot(d2, w3, precision=hp) + b3)
    y = jnp.concatenate(
        [jnp.ones((g_s.shape[0], 1)), jnp.zeros((g_t.shape[0], 1))], axis=0)
    bce = -(y * jnp.log(d) + (1.0 - y) * jnp.log(1.0 - d))
    return jnp.mean(bce)


if __name__ == "__main__":
    # small deterministic shapes
    Bs, Bt = 2, 2          # source / target batch
    C = 4                  # num classes
    F = 32                 # features_dim  (C*F = 128 -> one lane tile)
    H = 32                 # discriminator hidden width

    key = jax.random.PRNGKey(0)
    k = jax.random.split(key, 10)

    g_s = jax.random.normal(k[0], (Bs, C), jnp.float32)
    f_s = jax.random.normal(k[1], (Bs, F), jnp.float32)
    g_t = jax.random.normal(k[2], (Bt, C), jnp.float32)
    f_t = jax.random.normal(k[3], (Bt, F), jnp.float32)

    # domain discriminator: Linear(C*F, H) -> ReLU -> Linear(H, H) -> ReLU
    #                       -> Linear(H, 1) -> Sigmoid
    w1 = 0.1 * jax.random.normal(k[4], (C * F, H), jnp.float32)
    b1 = 0.1 * jax.random.normal(k[5], (1, H), jnp.float32)
    w2 = 0.1 * jax.random.normal(k[6], (H, H), jnp.float32)
    b2 = 0.1 * jax.random.normal(k[7], (1, H), jnp.float32)
    w3 = 0.1 * jax.random.normal(k[8], (H, 1), jnp.float32)
    b3 = 0.1 * jax.random.normal(k[9], (1, 1), jnp.float32)
    params = (w1, b1, w2, b2, w3, b3)

    out = cdan_loss(g_s, f_s, g_t, f_t, params)
    out = jax.block_until_ready(out)

    ref = cdan_loss_reference(g_s, f_s, g_t, f_t, params)
    assert jnp.allclose(out, ref, rtol=1e-4, atol=1e-6), (out, ref)

    print("KERNEL_OK")
</pallas_src>

<mosaic_0001>
module attributes {stable_mosaic.version = 11 : i64} {
  func.func @_cdan_kernel(%arg0: i32, %arg1: memref<2x4xf32, #tpu.memory_space<vmem>>, %arg2: memref<2x32xf32, #tpu.memory_space<vmem>>, %arg3: memref<2x4xf32, #tpu.memory_space<vmem>>, %arg4: memref<2x32xf32, #tpu.memory_space<vmem>>, %arg5: memref<128x32xf32, #tpu.memory_space<vmem>>, %arg6: memref<1x32xf32, #tpu.memory_space<vmem>>, %arg7: memref<32x32xf32, #tpu.memory_space<vmem>>, %arg8: memref<1x32xf32, #tpu.memory_space<vmem>>, %arg9: memref<1x32xf32, #tpu.memory_space<vmem>>, %arg10: memref<1x1xf32, #tpu.memory_space<smem>>, %arg11: memref<1x1xf32, #tpu.memory_space<vmem>>, %arg12: memref<4x128xf32, #tpu.memory_space<vmem>>) attributes {dimension_semantics = [#tpu.dimension_semantics<arbitrary>], iteration_bounds = array<i64: 1>, scalar_prefetch = 0 : i64, scratch_operands = 1 : i64, tpu.core_type = #tpu.core_type<tc>, window_params = [{transform_indices = @transform_0, window_bounds = array<i64: 2, 4>}, {transform_indices = @transform_1, window_bounds = array<i64: 2, 32>}, {transform_indices = @transform_2, window_bounds = array<i64: 2, 4>}, {transform_indices = @transform_3, window_bounds = array<i64: 2, 32>}, {pipeline_mode = #tpu.pipeline_mode<synchronous>, transform_indices = @transform_4, window_bounds = array<i64: 128, 32>}, {pipeline_mode = #tpu.pipeline_mode<synchronous>, transform_indices = @transform_5, window_bounds = array<i64: 1, 32>}, {pipeline_mode = #tpu.pipeline_mode<synchronous>, transform_indices = @transform_6, window_bounds = array<i64: 32, 32>}, {pipeline_mode = #tpu.pipeline_mode<synchronous>, transform_indices = @transform_7, window_bounds = array<i64: 1, 32>}, {pipeline_mode = #tpu.pipeline_mode<synchronous>, transform_indices = @transform_8, window_bounds = array<i64: 1, 32>}, {transform_indices = @transform_9, window_bounds = array<i64: 1, 1>}, {pipeline_mode = #tpu.pipeline_mode<synchronous>, transform_indices = @transform_10, window_bounds = array<i64: 1, 1>}]} {
    %c0_i32 = arith.constant 0 : i32
    %0 = arith.cmpi eq, %arg0, %c0_i32 : i32
    %1 = arith.extui %0 : i1 to i32
    %c0_i32_0 = arith.constant 0 : i32
    %2 = arith.cmpi ne, %1, %c0_i32_0 : i32
    scf.if %2 {
      %cst_55 = arith.constant 0.000000e+00 : f32
      %118 = vector.broadcast %cst_55 : f32 to vector<1x1xf32>
      %c0_56 = arith.constant 0 : index
      %c0_57 = arith.constant 0 : index
      %119 = vector.load %arg11[%c0_56, %c0_57] : memref<1x1xf32, #tpu.memory_space<vmem>>, vector<1x1xf32>
      tpu.vector_store %arg11[%c0_56, %c0_57], %118 {strides = array<i32>} : memref<1x1xf32, #tpu.memory_space<vmem>>, vector<1x1xf32>,
    } else {
    }
    %c0 = arith.constant 0 : index
    %c0_1 = arith.constant 0 : index
    %3 = vector.load %arg1[%c0, %c0_1] : memref<2x4xf32, #tpu.memory_space<vmem>>, vector<2x4xf32>
    %c0_2 = arith.constant 0 : index
    %c0_3 = arith.constant 0 : index
    %4 = vector.load %arg2[%c0_2, %c0_3] : memref<2x32xf32, #tpu.memory_space<vmem>>, vector<2x32xf32>
    %cst = arith.constant dense<0xFF800000> : vector<2xf32>
    %5 = vector.multi_reduction <maximumf>, %3, %cst [1] : vector<2x4xf32> to vector<2xf32>
    %6 = vector.shape_cast %5 : vector<2xf32> to vector<2x1xf32>
    %7 = vector.broadcast %6 : vector<2x1xf32> to vector<2x4xf32>
    %8 = arith.subf %3, %7 : vector<2x4xf32>
    %9 = math.exp %8 : vector<2x4xf32>
    %cst_4 = arith.constant dense<0.000000e+00> : vector<2xf32>
    %10 = vector.multi_reduction <add>, %9, %cst_4 [1] : vector<2x4xf32> to vector<2xf32>
    %11 = vector.shape_cast %10 : vector<2xf32> to vector<2x1xf32>
    %12 = tpu.reciprocal %11 : vector<2x1xf32> -> vector<2x1xf32>
    %13 = vector.broadcast %12 : vector<2x1xf32> to vector<2x4xf32>
    %14 = arith.mulf %9, %13 : vector<2x4xf32>
    %15 = vector.extract_strided_slice %14 {offsets = [0, 0], sizes = [2, 1], strides = [1, 1]} : vector<2x4xf32> to vector<2x1xf32>
    %16 = vector.broadcast %15 : vector<2x1xf32> to vector<2x32xf32>
    %17 = arith.mulf %16, %4 : vector<2x32xf32>
    %c0_5 = arith.constant 0 : index
    %c0_6 = arith.constant 0 : index
    %18 = vector.load %arg12[%c0_5, %c0_6] : memref<4x128xf32, #tpu.memory_space<vmem>>, vector<2x32xf32>
    tpu.vector_store %arg12[%c0_5, %c0_6], %17 {strides = array<i32>} : memref<4x128xf32, #tpu.memory_space<vmem>>, vector<2x32xf32>,
    %19 = vector.extract_strided_slice %14 {offsets = [0, 1], sizes = [2, 1], strides = [1, 1]} : vector<2x4xf32> to vector<2x1xf32>
    %20 = vector.broadcast %19 : vector<2x1xf32> to vector<2x32xf32>
    %21 = arith.mulf %20, %4 : vector<2x32xf32>
    %c0_7 = arith.constant 0 : index
    %c32 = arith.constant 32 : index
    %22 = vector.load %arg12[%c0_7, %c32] : memref<4x128xf32, #tpu.memory_space<vmem>>, vector<2x32xf32>
    tpu.vector_store %arg12[%c0_7, %c32], %21 {strides = array<i32>} : memref<4x128xf32, #tpu.memory_space<vmem>>, vector<2x32xf32>,
    %23 = vector.extract_strided_slice %14 {offsets = [0, 2], sizes = [2, 1], strides = [1, 1]} : vector<2x4xf32> to vector<2x1xf32>
    %24 = vector.broadcast %23 : vector<2x1xf32> to vector<2x32xf32>
    %25 = arith.mulf %24, %4 : vector<2x32xf32>
    %c0_8 = arith.constant 0 : index
    %c64 = arith.constant 64 : index
    %26 = vector.load %arg12[%c0_8, %c64] : memref<4x128xf32, #tpu.memory_space<vmem>>, vector<2x32xf32>
    tpu.vector_store %arg12[%c0_8, %c64], %25 {strides = array<i32>} : memref<4x128xf32, #tpu.memory_space<vmem>>, vector<2x32xf32>,
    %27 = vector.extract_strided_slice %14 {offsets = [0, 3], sizes = [2, 1], strides = [1, 1]} : vector<2x4xf32> to vector<2x1xf32>
    %28 = vector.broadcast %27 : vector<2x1xf32> to vector<2x32xf32>
    %29 = arith.mulf %28, %4 : vector<2x32xf32>
    %c0_9 = arith.constant 0 : index
    %c96 = arith.constant 96 : index
    %30 = vector.load %arg12[%c0_9, %c96] : memref<4x128xf32, #tpu.memory_space<vmem>>, vector<2x32xf32>
    tpu.vector_store %arg12[%c0_9, %c96], %29 {strides = array<i32>} : memref<4x128xf32, #tpu.memory_space<vmem>>, vector<2x32xf32>,
    %c0_10 = arith.constant 0 : index
    %c0_11 = arith.constant 0 : index
    %31 = vector.load %arg3[%c0_10, %c0_11] : memref<2x4xf32, #tpu.memory_space<vmem>>, vector<2x4xf32>
    %c0_12 = arith.constant 0 : index
    %c0_13 = arith.constant 0 : index
    %32 = vector.load %arg4[%c0_12, %c0_13] : memref<2x32xf32, #tpu.memory_space<vmem>>, vector<2x32xf32>
    %cst_14 = arith.constant dense<0xFF800000> : vector<2xf32>
    %33 = vector.multi_reduction <maximumf>, %31, %cst_14 [1] : vector<2x4xf32> to vector<2xf32>
    %34 = vector.shape_cast %33 : vector<2xf32> to vector<2x1xf32>
    %35 = vector.broadcast %34 : vector<2x1xf32> to vector<2x4xf32>
    %36 = arith.subf %31, %35 : vector<2x4xf32>
    %37 = math.exp %36 : vector<2x4xf32>
    %cst_15 = arith.constant dense<0.000000e+00> : vector<2xf32>
    %38 = vector.multi_reduction <add>, %37, %cst_15 [1] : vector<2x4xf32> to vector<2xf32>
    %39 = vector.shape_cast %38 : vector<2xf32> to vector<2x1xf32>
    %40 = tpu.reciprocal %39 : vector<2x1xf32> -> vector<2x1xf32>
    %41 = vector.broadcast %40 : vector<2x1xf32> to vector<2x4xf32>
    %42 = arith.mulf %37, %41 : vector<2x4xf32>
    %43 = vector.extract_strided_slice %42 {offsets = [0, 0], sizes = [2, 1], strides = [1, 1]} : vector<2x4xf32> to vector<2x1xf32>
    %44 = vector.broadcast %43 : vector<2x1xf32> to vector<2x32xf32>
    %45 = arith.mulf %44, %32 : vector<2x32xf32>
    %c2 = arith.constant 2 : index
    %c0_16 = arith.constant 0 : index
    %46 = vector.load %arg12[%c2, %c0_16] : memref<4x128xf32, #tpu.memory_space<vmem>>, vector<2x32xf32>
    tpu.vector_store %arg12[%c2, %c0_16], %45 {strides = array<i32>} : memref<4x128xf32, #tpu.memory_space<vmem>>, vector<2x32xf32>,
    %47 = vector.extract_strided_slice %42 {offsets = [0, 1], sizes = [2, 1], strides = [1, 1]} : vector<2x4xf32> to vector<2x1xf32>
    %48 = vector.broadcast %47 : vector<2x1xf32> to vector<2x32xf32>
    %49 = arith.mulf %48, %32 : vector<2x32xf32>
    %c2_17 = arith.constant 2 : index
    %c32_18 = arith.constant 32 : index
    %50 = vector.load %arg12[%c2_17, %c32_18] : memref<4x128xf32, #tpu.memory_space<vmem>>, vector<2x32xf32>
    tpu.vector_store %arg12[%c2_17, %c32_18], %49 {strides = array<i32>} : memref<4x128xf32, #tpu.memory_space<vmem>>, vector<2x32xf32>,
    %51 = vector.extract_strided_slice %42 {offsets = [0, 2], sizes = [2, 1], strides = [1, 1]} : vector<2x4xf32> to vector<2x1xf32>
    %52 = vector.broadcast %51 : vector<2x1xf32> to vector<2x32xf32>
    %53 = arith.mulf %52, %32 : vector<2x32xf32>
    %c2_19 = arith.constant 2 : index
    %c64_20 = arith.constant 64 : index
    %54 = vector.load %arg12[%c2_19, %c64_20] : memref<4x128xf32, #tpu.memory_space<vmem>>, vector<2x32xf32>
    tpu.vector_store %arg12[%c2_19, %c64_20], %53 {strides = array<i32>} : memref<4x128xf32, #tpu.memory_space<vmem>>, vector<2x32xf32>,
    %55 = vector.extract_strided_slice %42 {offsets = [0, 3], sizes = [2, 1], strides = [1, 1]} : vector<2x4xf32> to vector<2x1xf32>
    %56 = vector.broadcast %55 : vector<2x1xf32> to vector<2x32xf32>
    %57 = arith.mulf %56, %32 : vector<2x32xf32>
    %c2_21 = arith.constant 2 : index
    %c96_22 = arith.constant 96 : index
    %58 = vector.load %arg12[%c2_21, %c96_22] : memref<4x128xf32, #tpu.memory_space<vmem>>, vector<2x32xf32>
    tpu.vector_store %arg12[%c2_21, %c96_22], %57 {strides = array<i32>} : memref<4x128xf32, #tpu.memory_space<vmem>>, vector<2x32xf32>,
    %c0_23 = arith.constant 0 : index
    %c0_24 = arith.constant 0 : index
    %59 = vector.load %arg12[%c0_23, %c0_24] : memref<4x128xf32, #tpu.memory_space<vmem>>, vector<4x128xf32>
    %c0_25 = arith.constant 0 : index
    %c0_26 = arith.constant 0 : index
    %60 = vector.load %arg5[%c0_25, %c0_26] : memref<128x32xf32, #tpu.memory_space<vmem>>, vector<128x32xf32>
    %cst_27 = arith.constant dense<0.000000e+00> : vector<4x32xf32>
    %61 = tpu.matmul %59, %60, %cst_27 {dimension_numbers = #tpu.dot_dimension_numbers<[1], [0], [0], [1], [0, 0, 1, 1], [], []>} : vector<4x128xf32>, vector<128x32xf32>, vector<4x32xf32> -> vector<4x32xf32>
    %c0_28 = arith.constant 0 : index
    %c0_29 = arith.constant 0 : index
    %62 = vector.load %arg6[%c0_28, %c0_29] : memref<1x32xf32, #tpu.memory_space<vmem>>, vector<1x32xf32>
    %63 = vector.broadcast %62 : vector<1x32xf32> to vector<4x32xf32>
    %64 = arith.addf %61, %63 : vector<4x32xf32>
    %cst_30 = arith.constant 0.000000e+00 : f32
    %65 = vector.broadcast %cst_30 : f32 to vector<4x32xf32>
    %66 = arith.maximumf %64, %65 : vector<4x32xf32>
    %c0_31 = arith.constant 0 : index
    %c0_32 = arith.constant 0 : index
    %67 = vector.load %arg7[%c0_31, %c0_32] : memref<32x32xf32, #tpu.memory_space<vmem>>, vector<32x32xf32>
    %cst_33 = arith.constant dense<0.000000e+00> : vector<4x32xf32>
    %68 = tpu.matmul %66, %67, %cst_33 {dimension_numbers = #tpu.dot_dimension_numbers<[1], [0], [0], [1], [0, 0, 1, 1], [], []>} : vector<4x32xf32>, vector<32x32xf32>, vector<4x32xf32> -> vector<4x32xf32>
    %c0_34 = arith.constant 0 : index
    %c0_35 = arith.constant 0 : index
    %69 = vector.load %arg8[%c0_34, %c0_35] : memref<1x32xf32, #tpu.memory_space<vmem>>, vector<1x32xf32>
    %70 = vector.broadcast %69 : vector<1x32xf32> to vector<4x32xf32>
    %71 = arith.addf %68, %70 : vector<4x32xf32>
    %cst_36 = arith.constant 0.000000e+00 : f32
    %72 = vector.broadcast %cst_36 : f32 to vector<4x32xf32>
    %73 = arith.maximumf %71, %72 : vector<4x32xf32>
    %c0_37 = arith.constant 0 : index
    %c0_38 = arith.constant 0 : index
    %74 = vector.load %arg9[%c0_37, %c0_38] : memref<1x32xf32, #tpu.memory_space<vmem>>, vector<1x32xf32>
    %75 = vector.broadcast %74 : vector<1x32xf32> to vector<4x32xf32>
    %76 = arith.mulf %73, %75 : vector<4x32xf32>
    %cst_39 = arith.constant dense<0.000000e+00> : vector<4xf32>
    %77 = vector.multi_reduction <add>, %76, %cst_39 [1] : vector<4x32xf32> to vector<4xf32>
    %78 = vector.shape_cast %77 : vector<4xf32> to vector<4x1xf32>
    %c0_40 = arith.constant 0 : index
    %c0_41 = arith.constant 0 : index
    %79 = memref.load %arg10[%c0_40, %c0_41] : memref<1x1xf32, #tpu.memory_space<smem>>
    %80 = vector.broadcast %79 : f32 to vector<4x1xf32>
    %81 = arith.addf %78, %80 : vector<4x1xf32>
    %82 = arith.negf %81 : vector<4x1xf32>
    %83 = math.exp %82 : vector<4x1xf32>
    %cst_42 = arith.constant 1.000000e+00 : f32
    %84 = vector.broadcast %cst_42 : f32 to vector<4x1xf32>
    %85 = arith.addf %84, %83 : vector<4x1xf32>
    %86 = arith.divf %84, %85 : vector<4x1xf32>
    %87 = tpu.iota {dimensions = array<i32: 0>} : vector<4x1xi32>
    %c2_i32 = arith.constant 2 : i32
    %88 = vector.broadcast %c2_i32 : i32 to vector<4x1xi32>
    %89 = arith.cmpi slt, %87, %88 : vector<4x1xi32>
    %90 = arith.extui %89 : vector<4x1xi1> to vector<4x1xi32>
    %91 = arith.sitofp %90 : vector<4x1xi32> to vector<4x1xf32>
    %92 = math.log %86 : vector<4x1xf32>
    %cst_43 = arith.constant -1.000000e+02 : f32
    %93 = vector.broadcast %cst_43 : f32 to vector<4x1xf32>
    %94 = arith.maximumf %92, %93 : vector<4x1xf32>
    %cst_44 = arith.constant 1.000000e+00 : f32
    %95 = vector.broadcast %cst_44 : f32 to vector<4x1xf32>
    %96 = arith.subf %95, %86 : vector<4x1xf32>
    %97 = math.log %96 : vector<4x1xf32>
    %cst_45 = arith.constant -1.000000e+02 : f32
    %98 = vector.broadcast %cst_45 : f32 to vector<4x1xf32>
    %99 = arith.maximumf %97, %98 : vector<4x1xf32>
    %100 = arith.mulf %91, %94 : vector<4x1xf32>
    %cst_46 = arith.constant 1.000000e+00 : f32
    %101 = vector.broadcast %cst_46 : f32 to vector<4x1xf32>
    %102 = arith.subf %101, %91 : vector<4x1xf32>
    %103 = arith.mulf %102, %99 : vector<4x1xf32>
    %104 = arith.addf %100, %103 : vector<4x1xf32>
    %cst_47 = arith.constant 0.000000e+00 : f32
    %105 = vector.broadcast %cst_47 : f32 to vector<4x1xf32>
    %106 = arith.subf %105, %104 : vector<4x1xf32>
    %c0_48 = arith.constant 0 : index
    %c0_49 = arith.constant 0 : index
    %107 = vector.load %arg11[%c0_48, %c0_49] : memref<1x1xf32, #tpu.memory_space<vmem>>, vector<1x1xf32>
    %108 = vector.shape_cast %106 : vector<4x1xf32> to vector<1x4x1xf32>
    %cst_50 = arith.constant dense<0.000000e+00> : vector<1xf32>
    %109 = vector.multi_reduction <add>, %108, %cst_50 [1, 2] : vector<1x4x1xf32> to vector<1xf32>
    %110 = vector.shape_cast %109 : vector<1xf32> to vector<1x1x1xf32>
    %111 = vector.extract %110[0, 0, 0] : f32 from vector<1x1x1xf32>
    %112 = vector.broadcast %111 : f32 to vector<1x1xf32>
    %113 = arith.addf %107, %112 : vector<1x1xf32>
    %c0_51 = arith.constant 0 : index
    %c0_52 = arith.constant 0 : index
    %114 = vector.load %arg11[%c0_51, %c0_52] : memref<1x1xf32, #tpu.memory_space<vmem>>, vector<1x1xf32>
    tpu.vector_store %arg11[%c0_51, %c0_52], %113 {strides = array<i32>} : memref<1x1xf32, #tpu.memory_space<vmem>>, vector<1x1xf32>,
    %c0_i32_53 = arith.constant 0 : i32
    %115 = arith.cmpi eq, %arg0, %c0_i32_53 : i32
    %116 = arith.extui %115 : i1 to i32
    %c0_i32_54 = arith.constant 0 : i32
    %117 = arith.cmpi ne, %116, %c0_i32_54 : i32
    scf.if %117 {
      %c0_55 = arith.constant 0 : index
      %c0_56 = arith.constant 0 : index
      %118 = vector.load %arg11[%c0_55, %c0_56] : memref<1x1xf32, #tpu.memory_space<vmem>>, vector<1x1xf32>
      %cst_57 = arith.constant 4.000000e+00 : f32
      %119 = vector.broadcast %cst_57 : f32 to vector<1x1xf32>
      %120 = arith.divf %118, %119 : vector<1x1xf32>
      %c0_58 = arith.constant 0 : index
      %c0_59 = arith.constant 0 : index
      %121 = vector.load %arg11[%c0_58, %c0_59] : memref<1x1xf32, #tpu.memory_space<vmem>>, vector<1x1xf32>
      tpu.vector_store %arg11[%c0_58, %c0_59], %120 {strides = array<i32>} : memref<1x1xf32, #tpu.memory_space<vmem>>, vector<1x1xf32>,
    } else {
    }
    return
  }
  func.func @transform_0(%arg0: i32) -> (i32, i32) {
    %c0_i32 = arith.constant 0 : i32
    %c0_i32_0 = arith.constant 0 : i32
    return %arg0, %c0_i32 : i32, i32
  }
  func.func @transform_1(%arg0: i32) -> (i32, i32) {
    %c0_i32 = arith.constant 0 : i32
    %c0_i32_0 = arith.constant 0 : i32
    return %arg0, %c0_i32 : i32, i32
  }
  func.func @transform_2(%arg0: i32) -> (i32, i32) {
    %c0_i32 = arith.constant 0 : i32
    %c0_i32_0 = arith.constant 0 : i32
    return %arg0, %c0_i32 : i32, i32
  }
  func.func @transform_3(%arg0: i32) -> (i32, i32) {
    %c0_i32 = arith.constant 0 : i32
    %c0_i32_0 = arith.constant 0 : i32
    return %arg0, %c0_i32 : i32, i32
  }
  func.func @transform_4(%arg0: i32) -> (i32, i32) {
    %c0_i32 = arith.constant 0 : i32
    %c0_i32_0 = arith.constant 0 : i32
    %c0_i32_1 = arith.constant 0 : i32
    return %c0_i32, %c0_i32_0 : i32, i32
  }
  func.func @transform_5(%arg0: i32) -> (i32, i32) {
    %c0_i32 = arith.constant 0 : i32
    %c0_i32_0 = arith.constant 0 : i32
    %c0_i32_1 = arith.constant 0 : i32
    return %c0_i32, %c0_i32_0 : i32, i32
  }
  func.func @transform_6(%arg0: i32) -> (i32, i32) {
    %c0_i32 = arith.constant 0 : i32
    %c0_i32_0 = arith.constant 0 : i32
    %c0_i32_1 = arith.constant 0 : i32
    return %c0_i32, %c0_i32_0 : i32, i32
  }
  func.func @transform_7(%arg0: i32) -> (i32, i32) {
    %c0_i32 = arith.constant 0 : i32
    %c0_i32_0 = arith.constant 0 : i32
    %c0_i32_1 = arith.constant 0 : i32
    return %c0_i32, %c0_i32_0 : i32, i32
  }
  func.func @transform_8(%arg0: i32) -> (i32, i32) {
    %c0_i32 = arith.constant 0 : i32
    %c0_i32_0 = arith.constant 0 : i32
    %c0_i32_1 = arith.constant 0 : i32
    return %c0_i32, %c0_i32_0 : i32, i32
  }
  func.func @transform_9(%arg0: i32) -> (i32, i32) {
    %c0_i32 = arith.constant 0 : i32
    %c0_i32_0 = arith.constant 0 : i32
    %c0_i32_1 = arith.constant 0 : i32
    return %c0_i32, %c0_i32_0 : i32, i32
  }
  func.func @transform_10(%arg0: i32) -> (i32, i32) {
    %c0_i32 = arith.constant 0 : i32
    %c0_i32_0 = arith.constant 0 : i32
    %c0_i32_1 = arith.constant 0 : i32
    return %c0_i32, %c0_i32_0 : i32, i32
  }
}

</mosaic_0001>

<llo_original>
// kernel: tpu_custom_call.1
$region0: #{tpu_custom_call.1}
  #allocation0 [shape = 'u32[]', space=smem, size = 0x4, offset = 0x4, fixed_abs, tag = 'smem constant byte address 0x4 - core index']
  #allocation1 [shape = 'u32[144,128]{1,0:T(1,128)}', space=vmem, size = 0x12000, scoped, tag = 'internal scratch']
  #allocation2 [shape = 'f32[4,128]{1,0:T(4,128)}', space=vmem, size = 0x800, scoped, tag = 'scratch operand']
  #allocation3 [shape = 'f32[1,1]{1,0:T(1,128)S(6)}', space=smem, size = 0x200, scoped, tag = 'scoped memory for tpu_custom_call.1']
  %s0 = inlined_call_operand.vmem [shape: f32[2,4], index: 0, kind: input, shape index: {}]
  %s1 = inlined_call_operand.vmem [shape: f32[2,32], index: 1, kind: input, shape index: {}]
  %s2 = inlined_call_operand.vmem [shape: f32[2,4], index: 2, kind: input, shape index: {}]
  %s3 = inlined_call_operand.vmem [shape: f32[2,32], index: 3, kind: input, shape index: {}]
  %s4 = inlined_call_operand.vmem [shape: f32[128,32], index: 4, kind: input, shape index: {}]
  %s5 = inlined_call_operand.vmem [shape: f32[1,32], index: 5, kind: input, shape index: {}]
  %s6 = inlined_call_operand.vmem [shape: f32[32,32], index: 6, kind: input, shape index: {}]
  %s7 = inlined_call_operand.vmem [shape: f32[1,32], index: 7, kind: input, shape index: {}]
  %s8 = inlined_call_operand.vmem [shape: f32[1,32], index: 8, kind: input, shape index: {}]
  %s9 = inlined_call_operand.<no memory space> [shape: f32[1,1], index: 9, kind: input, shape index: {}]
  %s10 = inlined_call_operand.hbm [shape: f32[1,1], index: 10, kind: output, shape index: {}]
  %s11 = sld [smem:[#allocation0]]
  $region58: #{tpu_custom_call.1} parent=0
    _
  %s13 = ssub.s32 1, %s11
  %s14 = scalar_select 0, %s13, %s11
  %15 = sst [smem:[#allocation3]] %s9
  $region1: #{tpu_custom_call.1} parent=0
    #allocation4 [shape = 'u8[512]{0}', space=vmem, size = 0x400, scoped, tag = 'output window, operand 0, single buffered']
    #allocation5 [shape = 's32[1]{0}', space=sflag, size = 0x4, scoped, tag = 'scoped memory for tpu_custom_call.1']
    %16 = vsyncpa [#allocation5], 0
    // Predicated region
    $region2: #{tpu_custom_call.1} parent=1 // pred_check
      _
    $region3: #{tpu_custom_call.1} parent=1 // pred_check_branch
      %18 = sbr.rel (0) target = $region5
    $region4: #{tpu_custom_call.1} parent=1 // pred_region
      _
    $region5: #{tpu_custom_call.1} parent=1 // pred_fallthru
      _
    // Predicated region
    $region6: #{tpu_custom_call.1} parent=1 // pred_check
      _
    $region7: #{tpu_custom_call.1} parent=1 // pred_check_branch
      %20 = sbr.rel (0) target = $region9
    $region8: #{tpu_custom_call.1} parent=1 // pred_region
      _
    $region9: #{tpu_custom_call.1} parent=1 // pred_fallthru
      _
    // Predicated region
    $region10: #{tpu_custom_call.1} parent=1 // pred_check
      _
    $region11: #{tpu_custom_call.1} parent=1 // pred_check_branch
      %22 = sbr.rel (0) target = $region13
    $region12: #{tpu_custom_call.1} parent=1 // pred_region
      _
    $region13: #{tpu_custom_call.1} parent=1 // pred_fallthru
      _
    // Predicated region
    $region14: #{tpu_custom_call.1} parent=1 // pred_check
      _
    $region15: #{tpu_custom_call.1} parent=1 // pred_check_branch
      %24 = sbr.rel (0) target = $region17
    $region16: #{tpu_custom_call.1} parent=1 // pred_region
      _
    $region17: #{tpu_custom_call.1} parent=1 // pred_fallthru
      _
    // Predicated region
    $region18: #{tpu_custom_call.1} parent=1 // pred_check
      _
    $region19: #{tpu_custom_call.1} parent=1 // pred_check_branch
      %26 = sbr.rel (0) target = $region21
    $region20: #{tpu_custom_call.1} parent=1 // pred_region
      _
    $region21: #{tpu_custom_call.1} parent=1 // pred_fallthru
      _
    // Predicated region
    $region22: #{tpu_custom_call.1} parent=1 // pred_check
      _
    $region23: #{tpu_custom_call.1} parent=1 // pred_check_branch
      %28 = sbr.rel (0) target = $region25
    $region24: #{tpu_custom_call.1} parent=1 // pred_region
      _
    $region25: #{tpu_custom_call.1} parent=1 // pred_fallthru
      _
    // Predicated region
    $region26: #{tpu_custom_call.1} parent=1 // pred_check
      _
    $region27: #{tpu_custom_call.1} parent=1 // pred_check_branch
      %30 = sbr.rel (0) target = $region29
    $region28: #{tpu_custom_call.1} parent=1 // pred_region
      _
    $region29: #{tpu_custom_call.1} parent=1 // pred_fallthru
      _
    // Predicated region
    $region30: #{tpu_custom_call.1} parent=1 // pred_check
      _
    $region31: #{tpu_custom_call.1} parent=1 // pred_check_branch
      %32 = sbr.rel (0) target = $region33
    $region32: #{tpu_custom_call.1} parent=1 // pred_region
      _
    $region33: #{tpu_custom_call.1} parent=1 // pred_fallthru
      _
    // Predicated region
    $region34: #{tpu_custom_call.1} parent=1 // pred_check
      _
    $region35: #{tpu_custom_call.1} parent=1 // pred_check_branch
      %34 = sbr.rel (0) target = $region37
    $region36: #{tpu_custom_call.1} parent=1 // pred_region
      _
    $region37: #{tpu_custom_call.1} parent=1 // pred_fallthru
      _
    // Predicated region
    $region38: #{tpu_custom_call.1} parent=1 // pred_check
      _
    $region39: #{tpu_custom_call.1} parent=1 // pred_check_branch
      %36 = sbr.rel (0) target = $region41
    $region40: #{tpu_custom_call.1} parent=1 // pred_region
      _
    $region41: #{tpu_custom_call.1} parent=1 // pred_fallthru
      _
    %p37 = scmp.eq.s32.totalorder 0, 0
    // Predicated region
    $region42: #{tpu_custom_call.1} parent=1 // pred_check
      %p38 = pneg %p37
    $region43: #{tpu_custom_call.1} parent=1 // pred_check_branch
      %40 = sbr.rel (%p38) target = $region45
    $region44: #{tpu_custom_call.1} parent=1 // pred_region
      %vm41 = vcmask 0
      %42 = vst.msk [vmem:[#allocation4] sm:$0x1] %vm41, 0.0
    $region45: #{tpu_custom_call.1} parent=1 // pred_fallthru
      _
    %v43 = vld [vmem:[%s0] sm:$0x3]
    %v44 = vld [vmem:[%s1] sm:$0x3]
    %vm45 = vcmask 25600
    %v46 = vsel %vm45, %v43, -inf
    %47 = vmax.xlane.f32.xlu0 %v46
    %v48 = vpop.xlane.xlu0 %47
    %v49 = vsub.f32 %v43, %v48
    %v50 = vmul.f32 %v49, 1.442695
    %v51 = vpow.pop %v50
    %v52 = vsel %vm45, %v51, 0.0
    %53 = vadd.xlane.f32.xlu0 %v52
    %v54 = vpop.xlane.xlu0 %53
    %v55 = vrcp.pop %v54
    %v56 = vmul.f32 %v51, %v55
    %58 = vset.pattern.permute.xlu0 0
    %59 = vperm.xlu0 %58, %v56
    %v60 = vpop.permute.xlu0 %59
    %v62 = vmul.f32 %v60, %v44
    %vm63 = vcmask 254976
    %64 = vst.msk [vmem:[#allocation2] sm:$0x3] %vm63, %v62
    %65 = vset.pattern.permute.xlu0 1
    %66 = vperm.xlu0 %65, %v56
    %v67 = vpop.permute.xlu0 %66
    %v69 = vmul.f32 %v67, %v44
    %71 = vrot.lane.b32.xlu0 %v69, 32
    %v72 = vpop.permute.xlu0 %71
    %vm74 = vcmask 517376
    %75 = vst.msk [vmem:[#allocation2] sm:$0x3] %vm74, %v72
    %76 = vset.pattern.permute.xlu0 2
    %77 = vperm.xlu0 %76, %v56
    %v78 = vpop.permute.xlu0 %77
    %v80 = vmul.f32 %v78, %v44
    %82 = vrot.lane.b32.xlu0 %v80, 64
    %v83 = vpop.permute.xlu0 %82
    %vm85 = vcmask 779776
    %86 = vst.msk [vmem:[#allocation2] sm:$0x3] %vm85, %v83
    %87 = vset.pattern.permute.xlu0 3
    %88 = vperm.xlu0 %87, %v56
    %v89 = vpop.permute.xlu0 %88
    %v91 = vmul.f32 %v89, %v44
    %93 = vrot.lane.b32.xlu0 %v91, 96
    %v94 = vpop.permute.xlu0 %93
    %vm96 = vcmask 1042176
    %97 = vst.msk [vmem:[#allocation2] sm:$0x3] %vm96, %v94
    %v98 = vld [vmem:[%s2] sm:$0x3]
    %v99 = vld [vmem:[%s3] sm:$0x3]
    %v100 = vsel %vm45, %v98, -inf
    %101 = vmax.xlane.f32.xlu0 %v100
    %v102 = vpop.xlane.xlu0 %101
    %v103 = vsub.f32 %v98, %v102
    %v104 = vmul.f32 %v103, 1.442695
    %v105 = vpow.pop %v104
    %v106 = vsel %vm45, %v105, 0.0
    %107 = vadd.xlane.f32.xlu0 %v106
    %v108 = vpop.xlane.xlu0 %107
    %v109 = vrcp.pop %v108
    %v110 = vmul.f32 %v105, %v109
    %112 = vset.pattern.permute.xlu0 0
    %113 = vperm.xlu0 %112, %v110
    %v114 = vpop.permute.xlu0 %113
    %v116 = vmul.f32 %v114, %v99
    %117 = vst.msk [vmem:[#allocation2 + $0x2] sm:$0x3] %vm63, %v116
    %118 = vset.pattern.permute.xlu0 1
    %119 = vperm.xlu0 %118, %v110
    %v120 = vpop.permute.xlu0 %119
    %v122 = vmul.f32 %v120, %v99
    %124 = vrot.lane.b32.xlu0 %v122, 32
    %v125 = vpop.permute.xlu0 %124
    %127 = vst.msk [vmem:[#allocation2 + $0x2] sm:$0x3] %vm74, %v125
    %128 = vset.pattern.permute.xlu0 2
    %129 = vperm.xlu0 %128, %v110
    %v130 = vpop.permute.xlu0 %129
    %v132 = vmul.f32 %v130, %v99
    %134 = vrot.lane.b32.xlu0 %v132, 64
    %v135 = vpop.permute.xlu0 %134
    %137 = vst.msk [vmem:[#allocation2 + $0x2] sm:$0x3] %vm85, %v135
    %138 = vset.pattern.permute.xlu0 3
    %139 = vperm.xlu0 %138, %v110
    %v140 = vpop.permute.xlu0 %139
    %v142 = vmul.f32 %v140, %v99
    %144 = vrot.lane.b32.xlu0 %v142, 96
    %v145 = vpop.permute.xlu0 %144
    %147 = vst.msk [vmem:[#allocation2 + $0x2] sm:$0x3] %vm96, %v145
    %v148 = vld [vmem:[#allocation2] sm:$0xf]
    %v149 = vld [vmem:[%s4] sm:$0xff]
    %v150 = vld [vmem:[%s4 + $0x8] sm:$0xff]
    %v151 = vld [vmem:[%s4 + $0x10] sm:$0xff]
    %v152 = vld [vmem:[%s4 + $0x18] sm:$0xff]
    %v153 = vld [vmem:[%s4 + $0x20] sm:$0xff]
    %v154 = vld [vmem:[%s4 + $0x28] sm:$0xff]
    %v155 = vld [vmem:[%s4 + $0x30] sm:$0xff]
    %v156 = vld [vmem:[%s4 + $0x38] sm:$0xff]
    %v157 = vld [vmem:[%s4 + $0x40] sm:$0xff]
    %v158 = vld [vmem:[%s4 + $0x48] sm:$0xff]
    %v159 = vld [vmem:[%s4 + $0x50] sm:$0xff]
    %v160 = vld [vmem:[%s4 + $0x58] sm:$0xff]
    %v161 = vld [vmem:[%s4 + $0x60] sm:$0xff]
    %v162 = vld [vmem:[%s4 + $0x68] sm:$0xff]
    %v163 = vld [vmem:[%s4 + $0x70] sm:$0xff]
    %v164 = vld [vmem:[%s4 + $0x78] sm:$0xff]
    %v165 = vld [vmem:[%s5] sm:$0x1]
    %v167 = vlaneseq
    %v168 = vshrl.u32 %v167, 7
    %v169 = vsub.s32 0, %v168
    %v170 = vrot.slane %v165, %v169
    %172 = vmatprep.subr.mxu0 0.0
    %173 = vmatpush1.msra.mxu0 %v149
    %174 = vmatprep.subr.mxu0 0.0
    %175 = vmatpush1.msra.mxu0 %v150
    %176 = vmatprep.subr.mxu0 0.0
    %177 = vmatpush1.msra.mxu0 %v151
    %178 = vmatprep.subr.mxu0 0.0
    %179 = vmatpush1.msra.mxu0 %v152
    %180 = vmatprep.subr.mxu0 0.0
    %181 = vmatpush1.msra.mxu0 %v153
    %182 = vmatprep.subr.mxu0 0.0
    %183 = vmatpush1.msra.mxu0 %v154
    %184 = vmatprep.subr.mxu0 0.0
    %185 = vmatpush1.msra.mxu0 %v155
    %186 = vmatprep.subr.mxu0 0.0
    %187 = vmatpush1.msra.mxu0 %v156
    %188 = vmatprep.subr.mxu0 0.0
    %189 = vmatpush1.msra.mxu0 %v157
    %190 = vmatprep.subr.mxu0 0.0
    %191 = vmatpush1.msra.mxu0 %v158
    %192 = vmatprep.subr.mxu0 0.0
    %193 = vmatpush1.msra.mxu0 %v159
    %194 = vmatprep.subr.mxu0 0.0
    %195 = vmatpush1.msra.mxu0 %v160
    %196 = vmatprep.subr.mxu0 0.0
    %197 = vmatpush1.msra.mxu0 %v161
    %198 = vmatprep.subr.mxu0 0.0
    %199 = vmatpush1.msra.mxu0 %v162
    %200 = vmatprep.subr.mxu0 0.0
    %201 = vmatpush1.msra.mxu0 %v163
    %202 = vmatprep.subr.mxu0 0.0
    %203 = vmatpush1.msra.mxu0 %v164
    %204 = vmatprep.subr.mxu0 0.0
    %205 = vmatpush1.msra.mxu0 0.0
    %206 = vmatprep.subr.mxu0 0.0
    %207 = vmatpush1.msra.mxu0 0.0
    %208 = vmatprep.subr.mxu0 0.0
    %209 = vmatpush1.msra.mxu0 0.0
    %210 = vmatprep.subr.mxu0 0.0
    %211 = vmatpush1.msra.mxu0 0.0
    %212 = vmatprep.subr.mxu0 0.0
    %213 = vmatpush1.msra.mxu0 0.0
    %214 = vmatprep.subr.mxu0 0.0
    %215 = vmatpush1.msra.mxu0 0.0
    %216 = vmatprep.subr.mxu0 0.0
    %217 = vmatpush1.msra.mxu0 0.0
    %218 = vmatprep.subr.mxu0 0.0
    %219 = vmatpush1.msra.mxu0 0.0
    %220 = vmatprep.subr.mxu0 0.0
    %221 = vmatpush1.msra.mxu0 0.0
    %222 = vmatprep.subr.mxu0 0.0
    %223 = vmatpush1.msra.mxu0 0.0
    %224 = vmatprep.subr.mxu0 0.0
    %225 = vmatpush1.msra.mxu0 0.0
    %226 = vmatprep.subr.mxu0 0.0
    %227 = vmatpush1.msra.mxu0 0.0
    %228 = vmatprep.subr.mxu0 0.0
    %229 = vmatpush1.msra.mxu0 0.0
    %230 = vmatprep.subr.mxu0 0.0
    %231 = vmatpush1.msra.mxu0 0.0
    %232 = vmatprep.subr.mxu0 0.0
    %233 = vmatpush1.msra.mxu0 0.0
    %234 = vmatprep.subr.mxu0 0.0
    %235 = vmatpush1.msra.mxu0 0.0
    %236 = vmatprep.mubr.f32.mxu0 0.0
    %237 = vmatmul.mubr.f32.gmra.mrb[0].mxu0 %v148
    %v238 = vpop.f32.mrb[0].mxu0
    %v239 = vadd.f32 %v170, %v238
    %v240 = vpop.f32.mrb[0].mxu0
    %241 = vdwg.mxu0
    %v242 = vmax.f32 %v239, 0.0
    %v243 = vld [vmem:[%s6] sm:$0xff]
    %v244 = vld [vmem:[%s6 + $0x8] sm:$0xff]
    %v245 = vld [vmem:[%s6 + $0x10] sm:$0xff]
    %v246 = vld [vmem:[%s6 + $0x18] sm:$0xff]
    %v247 = vld [vmem:[%s7] sm:$0x1]
    %v249 = vlaneseq
    %v250 = vshrl.u32 %v249, 7
    %v251 = vsub.s32 0, %v250
    %v252 = vrot.slane %v247, %v251
    %vm254 = vcmask 261120
    %v256 = vsel %vm254, %v242, 0
    %258 = vmatprep.subr.mxu0 0.0
    %259 = vmatpush1.msra.mxu0 %v243
    %260 = vmatprep.subr.mxu0 0.0
    %261 = vmatpush1.msra.mxu0 %v244
    %262 = vmatprep.subr.mxu0 0.0
    %263 = vmatpush1.msra.mxu0 %v245
    %264 = vmatprep.subr.mxu0 0.0
    %265 = vmatpush1.msra.mxu0 %v246
    %266 = vmatprep.subr.mxu0 0.0
    %267 = vmatpush1.msra.mxu0 0.0
    %268 = vmatprep.subr.mxu0 0.0
    %269 = vmatpush1.msra.mxu0 0.0
    %270 = vmatprep.subr.mxu0 0.0
    %271 = vmatpush1.msra.mxu0 0.0
    %272 = vmatprep.subr.mxu0 0.0
    %273 = vmatpush1.msra.mxu0 0.0
    %274 = vmatprep.subr.mxu0 0.0
    %275 = vmatpush1.msra.mxu0 0.0
    %276 = vmatprep.subr.mxu0 0.0
    %277 = vmatpush1.msra.mxu0 0.0
    %278 = vmatprep.subr.mxu0 0.0
    %279 = vmatpush1.msra.mxu0 0.0
    %280 = vmatprep.subr.mxu0 0.0
    %281 = vmatpush1.msra.mxu0 0.0
    %282 = vmatprep.subr.mxu0 0.0
    %283 = vmatpush1.msra.mxu0 0.0
    %284 = vmatprep.subr.mxu0 0.0
    %285 = vmatpush1.msra.mxu0 0.0
    %286 = vmatprep.subr.mxu0 0.0
    %287 = vmatpush1.msra.mxu0 0.0
    %288 = vmatprep.subr.mxu0 0.0
    %289 = vmatpush1.msra.mxu0 0.0
    %290 = vmatprep.subr.mxu0 0.0
    %291 = vmatpush1.msra.mxu0 0.0
    %292 = vmatprep.subr.mxu0 0.0
    %293 = vmatpush1.msra.mxu0 0.0
    %294 = vmatprep.subr.mxu0 0.0
    %295 = vmatpush1.msra.mxu0 0.0
    %296 = vmatprep.subr.mxu0 0.0
    %297 = vmatpush1.msra.mxu0 0.0
    %298 = vmatprep.subr.mxu0 0.0
    %299 = vmatpush1.msra.mxu0 0.0
    %300 = vmatprep.subr.mxu0 0.0
    %301 = vmatpush1.msra.mxu0 0.0
    %302 = vmatprep.subr.mxu0 0.0
    %303 = vmatpush1.msra.mxu0 0.0
    %304 = vmatprep.subr.mxu0 0.0
    %305 = vmatpush1.msra.mxu0 0.0
    %306 = vmatprep.subr.mxu0 0.0
    %307 = vmatpush1.msra.mxu0 0.0
    %308 = vmatprep.subr.mxu0 0.0
    %309 = vmatpush1.msra.mxu0 0.0
    %310 = vmatprep.subr.mxu0 0.0
    %311 = vmatpush1.msra.mxu0 0.0
    %312 = vmatprep.subr.mxu0 0.0
    %313 = vmatpush1.msra.mxu0 0.0
    %314 = vmatprep.subr.mxu0 0.0
    %315 = vmatpush1.msra.mxu0 0.0
    %316 = vmatprep.subr.mxu0 0.0
    %317 = vmatpush1.msra.mxu0 0.0
    %318 = vmatprep.subr.mxu0 0.0
    %319 = vmatpush1.msra.mxu0 0.0
    %320 = vmatprep.subr.mxu0 0.0
    %321 = vmatpush1.msra.mxu0 0.0
    %322 = vmatprep.mubr.f32.mxu0 0.0
    %323 = vmatmul.mubr.f32.gmra.mrb[0].mxu0 %v256
    %v324 = vpop.f32.mrb[0].mxu0
    %v325 = vadd.f32 %v252, %v324
    %v326 = vpop.f32.mrb[0].mxu0
    %327 = vdwg.mxu0
    %v328 = vmax.f32 %v325, 0.0
    %v329 = vld [vmem:[%s8] sm:$0x1]
    %v331 = vlaneseq
    %v332 = vshrl.u32 %v331, 7
    %v333 = vsub.s32 0, %v332
    %v334 = vrot.slane %v329, %v333
    %v336 = vmul.f32 %v328, %v334
    %vm337 = vcmask 257024
    %v338 = vsel %vm337, %v336, 0.0
    %339 = vadd.xlane.f32.xlu0 %v338
    %v340 = vpop.xlane.xlu0 %339
    %s341 = sld [smem:[#allocation3]]
    %v342 = vstv %s341
    %v343 = vadd.f32 %v340, %v342
    %v344 = vxor.u32 %v343, 2147483648
    %v345 = vmul.f32 %v344, 1.442695
    %v346 = vpow.pop %v345
    %v347 = vadd.f32 %v346, 1.0
    %v348 = vrcp.pop %v347
    %v349 = vmul.f32 1.0, %v348
    %v350 = vlaneseq
    %v351 = vshrl.u32 %v350, 7
    %vm352 = vcmp.lt.s32.totalorder %v351, 2
    %v353 = vsel %vm352, 1, 0
    %v354 = vcvt.s32.f32 %v353
    %v355 = vlog2.pop %v349
    %v356 = vmul.f32 %v355, 0.6931472
    %v357 = vmax.f32 %v356, -100.0
    %v358 = vsub.f32 1.0, %v349
    %v359 = vlog2.pop %v358
    %v360 = vmul.f32 %v359, 0.6931472
    %v361 = vmax.f32 %v360, -100.0
    %v362 = vmul.f32 %v354, %v357
    %v363 = vsub.f32 1.0, %v354
    %v364 = vmul.f32 %v363, %v361
    %v365 = vadd.f32 %v362, %v364
    %v366 = vsub.f32 0.0, %v365
    %v367 = vld [vmem:[#allocation4] sm:$0x1]
    %vm368 = vcmask 3072
    %v369 = vsel %vm368, %v366, 0.0
    %370 = vadd.xlane.f32.xlu0 %v369
    %v371 = vpop.xlane.xlu0 %370
    %v372 = vrot.slane %v371, 4
    %v373 = vadd.f32 %v371, %v372
    %v374 = vrot.slane %v373, 2
    %v375 = vadd.f32 %v373, %v374
    %v376 = vrot.slane %v375, 1
    %v377 = vadd.f32 %v375, %v376
    %s378 = vtos %v377
    %v379 = vstv %s378
    %v380 = vadd.f32 %v367, %v379
    %vm381 = vcmask 0
    %382 = vst.msk [vmem:[#allocation4] sm:$0x1] %vm381, %v380
    // Predicated region
    $region46: #{tpu_custom_call.1} parent=1 // pred_check
      %p383 = pneg %p37
    $region47: #{tpu_custom_call.1} parent=1 // pred_check_branch
      %385 = sbr.rel (%p383) target = $region49
    $region48: #{tpu_custom_call.1} parent=1 // pred_region
      %v386 = vld [vmem:[#allocation4] sm:$0x1]
      %v387 = vrcp.pop 4.0
      %v388 = vmul.f32 %v386, %v387
      %389 = vst.msk [vmem:[#allocation4] sm:$0x1] %vm381, %v388
    $region49: #{tpu_custom_call.1} parent=1 // pred_fallthru
      _
    // Predicated region
    $region50: #{tpu_custom_call.1} parent=1 // pred_check
      _
    $region51: #{tpu_custom_call.1} parent=1 // pred_check_branch
      %391 = sbr.rel (0) target = $region53
    $region52: #{tpu_custom_call.1} parent=1 // pred_region
      %s393 = ssub.s32 16, 16
      %394 = vsyncadd [#allocation5], %s393
      %s396 = sshll.u32 [#allocation4], 4
      %s397 = int_to_ptr.vmem [resolvable:$true] %s396
      %399 = dma.vmem_to_hbm [thread:$0]  %s397, 16, %s10, [#allocation5]
    $region53: #{tpu_custom_call.1} parent=1 // pred_fallthru
      _
    // Predicated region
    $region54: #{tpu_custom_call.1} parent=1 // pred_check
      _
    $region55: #{tpu_custom_call.1} parent=1 // pred_check_branch
      %401 = sbr.rel (0) target = $region57
    $region56: #{tpu_custom_call.1} parent=1 // pred_region
      %402 = dma.done [#allocation5], 16
    $region57: #{tpu_custom_call.1} parent=1 // pred_fallthru
      _
    %403 = vsyncpa [#allocation5], 1

</llo_original>
